<compile_context>
chip_gen: v6e
topology: v6e:2x2x1
jax: 0.10.0
libtpu: 0.0.40
codegen_flags: <defaults>
</compile_context>

<pallas_src>
import functools

import jax
import jax.numpy as jnp
from jax.experimental import pallas as pl
from jax.experimental.pallas import tpu as pltpu


def _make_ce_kernel(B, C, TB, TC):
    M_LANE, L_LANE, T_LANE = 0, 1, 2   # lanes of the merged accumulator scratch

    def _lse_update(x_native, acc_ref):
        """Online logsumexp update from one (TB, TC) tile (f32 math, native-dtype max)."""
        # Row max is exact in the native dtype (bf16 max => packed 2x lanes/op on
        # v6e/v7x); exp / running-sum stay in f32.
        tile_max = jnp.max(x_native, axis=-1, keepdims=True).astype(jnp.float32)
        m_prev = acc_ref[:, M_LANE:M_LANE + 1]
        m_new = jnp.maximum(m_prev, tile_max)
        x = x_native.astype(jnp.float32)
        acc_ref[:, L_LANE:L_LANE + 1] = (
            acc_ref[:, L_LANE:L_LANE + 1] * jnp.exp(m_prev - m_new)
            + jnp.sum(jnp.exp(x - m_new), axis=-1, keepdims=True))
        acc_ref[:, M_LANE:M_LANE + 1] = m_new

    def kernel(logits_ref, targets_ref, out_ref, acc_ref):
        i = pl.program_id(0)                 # batch tile ("parallel")
        k = pl.program_id(1)                 # class tile (reduction, last, "arbitrary")
        nc = pl.num_programs(1)

        @pl.when(k == 0)
        def _init():
            lane128 = jax.lax.broadcasted_iota(jnp.int32, (TB, 128), 1)
            # lane 0: running max (-inf); lanes 1,2 (and the rest): 0.
            acc_ref[...] = jnp.where(lane128 == M_LANE,
                                     jnp.float32(-jnp.inf), jnp.float32(0.0))

        x_raw = logits_ref[...]                                     # (TB, TC) native dtype
        t = targets_ref[...]                                        # (TB, 1) int32
        lane = jax.lax.broadcasted_iota(jnp.int32, (TB, TC), 1)     # local lane iota

        # Running target logit: compare local lanes against t - k*TC ((TB,1) subtract,
        # no full-tile add). Safe on the unmasked tile: t < C never selects a padded
        # column, and jnp.where is a true select (garbage/NaN cannot leak).
        t_local = t - k * TC
        zero = jnp.array(0, dtype=x_raw.dtype)
        acc_ref[:, T_LANE:T_LANE + 1] += jnp.sum(
            jnp.where(lane == t_local, x_raw, zero),
            axis=-1, keepdims=True).astype(jnp.float32)

        if C % TC != 0:
            # Only the last class tile has padded (possibly garbage/NaN) columns:
            # mask there, keep every other tile on the cheap unmasked path.
            @pl.when(k < nc - 1)
            def _full_tile():
                _lse_update(x_raw, acc_ref)

            @pl.when(k == nc - 1)
            def _partial_tile():
                valid = lane < (C - k * TC)                     # scalar rhs
                neg_inf = jnp.array(-jnp.inf, dtype=x_raw.dtype)
                _lse_update(jnp.where(valid, x_raw, neg_inf), acc_ref)
        else:
            _lse_update(x_raw, acc_ref)

        @pl.when(k == nc - 1)
        def _finalize():
            nll = (acc_ref[:, M_LANE:M_LANE + 1]
                   + jnp.log(acc_ref[:, L_LANE:L_LANE + 1])
                   - acc_ref[:, T_LANE:T_LANE + 1])             # (TB, 1)
            if B % TB != 0:
                # Zero padded batch rows (true select: kills garbage/NaN rows).
                row = jax.lax.broadcasted_iota(jnp.int32, (TB, 1), 0) + i * TB
                nll = jnp.where(row < B, nll, 0.0)
            out_ref[...] = nll

    return kernel


@functools.lru_cache(maxsize=None)
def _hw_config():
    """(logits_block_bytes, vmem_limit_bytes), TPU-generation aware.

    v5e/v6e (128 MiB VMEM): 8 MiB blocks, 64 MiB scoped limit.
    v7x (64 MiB VMEM) or unknown: conservative 4 MiB blocks, 32 MiB limit so the
    double-buffered logits tiles never spill.
    """
    try:
        vmem = getattr(pltpu.get_tpu_info(), "vmem_capacity_bytes", None)
    except Exception:
        vmem = None
    if vmem is not None and vmem >= (100 << 20):
        return 8 << 20, 64 << 20
    return 4 << 20, 32 << 20


def _pick_tiles(B, C, itemsize, block_bytes):
    """Pick (batch_tile, class_tile) targeting ~block_bytes per logits block."""
    # Class tile first (grow tc, not tb -> longer contiguous DMA run per row):
    # whole vocab row if it fits a block at the minimum 8-row batch tile,
    # otherwise a large multiple of 128.
    tc_fit = max(128, (block_bytes // (8 * itemsize)) // 128 * 128)
    tc = C if C <= tc_fit else tc_fit

    if B <= 8:
        return B, tc                 # full batch dim is always a legal block size

    # Batch tile: multiple of 8, sized so a block is <= ~block_bytes, capped so the
    # "parallel" batch axis keeps >= 4 tiles (v7x two-TC sharding / load balance),
    # and capped at 2048 rows so the lane-padded (tb, 1) blocks / scratch stay small.
    rows = max(8, (block_bytes // (tc * itemsize)) // 8 * 8)
    quarter = max(8, ((B // 4) // 8) * 8)
    tb = min(rows, quarter, 2048)
    return tb, tc


@functools.partial(jax.jit, static_argnames=("tb", "tc"))
def cross_entropy_loss(logits, targets, *, tb=None, tc=None):
    """Mean cross-entropy of pre-softmax `logits` (B, C) vs int `targets` (B,)."""
    B, C = logits.shape
    itemsize = jnp.dtype(logits.dtype).itemsize
    block_bytes, vmem_limit = _hw_config()
    auto_tb, auto_tc = _pick_tiles(B, C, itemsize, block_bytes)
    tb = auto_tb if tb is None else tb
    tc = auto_tc if tc is None else tc
    nb, nc = pl.cdiv(B, tb), pl.cdiv(C, tc)

    targets2d = targets.astype(jnp.int32).reshape(B, 1)

    nll = pl.pallas_call(
        _make_ce_kernel(B, C, tb, tc),
        out_shape=jax.ShapeDtypeStruct((B, 1), jnp.float32),
        grid_spec=pltpu.PrefetchScalarGridSpec(
            num_scalar_prefetch=0,
            grid=(nb, nc),
            in_specs=[
                pl.BlockSpec((tb, tc), lambda i, k: (i, k)),    # logits tile
                pl.BlockSpec((tb, 1), lambda i, k: (i, 0)),     # targets tile
            ],
            out_specs=pl.BlockSpec((tb, 1), lambda i, k: (i, 0)),
            # merged accumulator: lane 0 = m, lane 1 = l, lane 2 = target logit
            scratch_shapes=[pltpu.VMEM((tb, 128), jnp.float32)],
        ),
        compiler_params=pltpu.CompilerParams(
            dimension_semantics=("parallel", "arbitrary"),
            vmem_limit_bytes=vmem_limit,
        ),
        cost_estimate=pl.CostEstimate(
            flops=5 * B * C,
            transcendentals=B * C,
            bytes_accessed=B * C * itemsize + 2 * B * 4,
        ),
    )(logits, targets2d)

    # TODO(synk): PyTorch's ignore_index=-100 / class weights are not implemented
    # (targets outside [0, C) would silently contribute logsumexp(row) only).
    return jnp.sum(nll) / jnp.float32(B)


if __name__ == "__main__":
    key = jax.random.PRNGKey(0)
    k1, k2, k3, k4, k5, k6 = jax.random.split(key, 6)

    def ref_ce(logits_f32, targets):
        b = logits_f32.shape[0]
        lp = jax.nn.log_softmax(logits_f32, axis=-1)
        return -jnp.mean(lp[jnp.arange(b), targets])

    # Test 1: small single-tile case matching the module's (batch, num_classes) layout.
    B1, C1 = 8, 32
    logits1 = jax.random.normal(k1, (B1, C1), dtype=jnp.float32)
    targets1 = jax.random.randint(k2, (B1,), 0, C1, dtype=jnp.int32)
    loss1 = cross_entropy_loss(logits1, targets1)
    jax.block_until_ready(loss1)
    assert jnp.allclose(loss1, ref_ce(logits1, targets1), atol=2e-5, rtol=2e-5), loss1

    # Test 2: multi-tile grid, aligned tiles (online-logsumexp, unmasked path).
    B2, C2 = 32, 256
    logits2 = jax.random.normal(k3, (B2, C2), dtype=jnp.float32)
    targets2 = jax.random.randint(k4, (B2,), 0, C2, dtype=jnp.int32)
    loss2 = cross_entropy_loss(logits2, targets2, tb=8, tc=128)
    jax.block_until_ready(loss2)
    assert jnp.allclose(loss2, ref_ce(logits2, targets2), atol=2e-5, rtol=2e-5), loss2

    # Test 3: bf16 logits + partial batch tile + partial (masked) last class tile.
    B3, C3 = 20, 200
    logits3 = jax.random.normal(k5, (B3, C3), dtype=jnp.float32).astype(jnp.bfloat16)
    targets3 = jax.random.randint(k6, (B3,), 0, C3, dtype=jnp.int32)
    loss3 = cross_entropy_loss(logits3, targets3, tb=8, tc=128)
    jax.block_until_ready(loss3)
    ref3 = ref_ce(logits3.astype(jnp.float32), targets3)
    assert jnp.allclose(loss3, ref3, atol=5e-5, rtol=5e-5), (loss3, ref3)

    print("KERNEL_OK")
</pallas_src>

<mosaic_0001>
module attributes {stable_mosaic.version = 11 : i64} {
  func.func @kernel(%arg0: i32, %arg1: i32, %arg2: memref<8x32xf32, #tpu.memory_space<vmem>>, %arg3: memref<8x1xi32, #tpu.memory_space<vmem>>, %arg4: memref<8x1xf32, #tpu.memory_space<vmem>>, %arg5: memref<8x128xf32, #tpu.memory_space<vmem>>) attributes {dimension_semantics = [#tpu.dimension_semantics<parallel>, #tpu.dimension_semantics<arbitrary>], iteration_bounds = array<i64: 1, 1>, scalar_prefetch = 0 : i64, scratch_operands = 1 : i64, tpu.core_type = #tpu.core_type<tc>, window_params = [{transform_indices = @transform_0, window_bounds = array<i64: 8, 32>}, {transform_indices = @transform_1, window_bounds = array<i64: 8, 1>}, {transform_indices = @transform_2, window_bounds = array<i64: 8, 1>}]} {
    %c0_i32 = arith.constant 0 : i32
    %0 = arith.cmpi eq, %arg1, %c0_i32 : i32
    %1 = arith.extui %0 : i1 to i32
    %c0_i32_0 = arith.constant 0 : i32
    %2 = arith.cmpi ne, %1, %c0_i32_0 : i32
    scf.if %2 {
      %37 = tpu.iota {dimensions = array<i32: 1>} : vector<8x128xi32>
      %c0_i32_19 = arith.constant 0 : i32
      %38 = vector.broadcast %c0_i32_19 : i32 to vector<8x128xi32>
      %39 = arith.cmpi eq, %37, %38 : vector<8x128xi32>
      %cst_20 = arith.constant 0xFF800000 : f32
      %cst_21 = arith.constant 0.000000e+00 : f32
      %40 = vector.broadcast %cst_20 : f32 to vector<8x128xf32>
      %41 = vector.broadcast %cst_21 : f32 to vector<8x128xf32>
      %42 = arith.select %39, %40, %41 : vector<8x128xi1>, vector<8x128xf32>
      %c0_22 = arith.constant 0 : index
      %c0_23 = arith.constant 0 : index
      %43 = vector.load %arg5[%c0_22, %c0_23] : memref<8x128xf32, #tpu.memory_space<vmem>>, vector<8x128xf32>
      tpu.vector_store %arg5[%c0_22, %c0_23], %42 {strides = array<i32>} : memref<8x128xf32, #tpu.memory_space<vmem>>, vector<8x128xf32>,
    } else {
    }
    %c0 = arith.constant 0 : index
    %c0_1 = arith.constant 0 : index
    %3 = vector.load %arg2[%c0, %c0_1] : memref<8x32xf32, #tpu.memory_space<vmem>>, vector<8x32xf32>
    %c0_2 = arith.constant 0 : index
    %c0_3 = arith.constant 0 : index
    %4 = vector.load %arg3[%c0_2, %c0_3] : memref<8x1xi32, #tpu.memory_space<vmem>>, vector<8x1xi32>
    %5 = tpu.iota {dimensions = array<i32: 1>} : vector<8x32xi32>
    %c32_i32 = arith.constant 32 : i32
    %6 = arith.muli %arg1, %c32_i32 : i32
    %7 = vector.broadcast %6 : i32 to vector<8x1xi32>
    %8 = arith.subi %4, %7 : vector<8x1xi32>
    %c0_4 = arith.constant 0 : index
    %c2 = arith.constant 2 : index
    %9 = vector.load %arg5[%c0_4, %c2] : memref<8x128xf32, #tpu.memory_space<vmem>>, vector<8x1xf32>
    %10 = vector.broadcast %8 : vector<8x1xi32> to vector<8x32xi32>
    %11 = arith.cmpi eq, %5, %10 : vector<8x32xi32>
    %cst = arith.constant 0.000000e+00 : f32
    %12 = vector.broadcast %cst : f32 to vector<8x32xf32>
    %13 = arith.select %11, %3, %12 : vector<8x32xi1>, vector<8x32xf32>
    %cst_5 = arith.constant dense<0.000000e+00> : vector<8xf32>
    %14 = vector.multi_reduction <add>, %13, %cst_5 [1] : vector<8x32xf32> to vector<8xf32>
    %15 = vector.shape_cast %14 : vector<8xf32> to vector<8x1xf32>
    %16 = arith.addf %9, %15 : vector<8x1xf32>
    %c0_6 = arith.constant 0 : index
    %c2_7 = arith.constant 2 : index
    %17 = vector.load %arg5[%c0_6, %c2_7] : memref<8x128xf32, #tpu.memory_space<vmem>>, vector<8x1xf32>
    tpu.vector_store %arg5[%c0_6, %c2_7], %16 {strides = array<i32>} : memref<8x128xf32, #tpu.memory_space<vmem>>, vector<8x1xf32>,
    %cst_8 = arith.constant dense<0xFF800000> : vector<8xf32>
    %18 = vector.multi_reduction <maximumf>, %3, %cst_8 [1] : vector<8x32xf32> to vector<8xf32>
    %19 = vector.shape_cast %18 : vector<8xf32> to vector<8x1xf32>
    %c0_9 = arith.constant 0 : index
    %c0_10 = arith.constant 0 : index
    %20 = vector.load %arg5[%c0_9, %c0_10] : memref<8x128xf32, #tpu.memory_space<vmem>>, vector<8x1xf32>
    %21 = arith.maximumf %20, %19 : vector<8x1xf32>
    %c0_11 = arith.constant 0 : index
    %c1 = arith.constant 1 : index
    %22 = vector.load %arg5[%c0_11, %c1] : memref<8x128xf32, #tpu.memory_space<vmem>>, vector<8x1xf32>
    %23 = arith.subf %20, %21 : vector<8x1xf32>
    %24 = math.exp %23 : vector<8x1xf32>
    %25 = arith.mulf %22, %24 : vector<8x1xf32>
    %26 = vector.broadcast %21 : vector<8x1xf32> to vector<8x32xf32>
    %27 = arith.subf %3, %26 : vector<8x32xf32>
    %28 = math.exp %27 : vector<8x32xf32>
    %cst_12 = arith.constant dense<0.000000e+00> : vector<8xf32>
    %29 = vector.multi_reduction <add>, %28, %cst_12 [1] : vector<8x32xf32> to vector<8xf32>
    %30 = vector.shape_cast %29 : vector<8xf32> to vector<8x1xf32>
    %31 = arith.addf %25, %30 : vector<8x1xf32>
    %c0_13 = arith.constant 0 : index
    %c1_14 = arith.constant 1 : index
    %32 = vector.load %arg5[%c0_13, %c1_14] : memref<8x128xf32, #tpu.memory_space<vmem>>, vector<8x1xf32>
    tpu.vector_store %arg5[%c0_13, %c1_14], %31 {strides = array<i32>} : memref<8x128xf32, #tpu.memory_space<vmem>>, vector<8x1xf32>,
    %c0_15 = arith.constant 0 : index
    %c0_16 = arith.constant 0 : index
    %33 = vector.load %arg5[%c0_15, %c0_16] : memref<8x128xf32, #tpu.memory_space<vmem>>, vector<8x1xf32>
    tpu.vector_store %arg5[%c0_15, %c0_16], %21 {strides = array<i32>} : memref<8x128xf32, #tpu.memory_space<vmem>>, vector<8x1xf32>,
    %c0_i32_17 = arith.constant 0 : i32
    %34 = arith.cmpi eq, %arg1, %c0_i32_17 : i32
    %35 = arith.extui %34 : i1 to i32
    %c0_i32_18 = arith.constant 0 : i32
    %36 = arith.cmpi ne, %35, %c0_i32_18 : i32
    scf.if %36 {
      %c0_19 = arith.constant 0 : index
      %c0_20 = arith.constant 0 : index
      %37 = vector.load %arg5[%c0_19, %c0_20] : memref<8x128xf32, #tpu.memory_space<vmem>>, vector<8x1xf32>
      %c0_21 = arith.constant 0 : index
      %c1_22 = arith.constant 1 : index
      %38 = vector.load %arg5[%c0_21, %c1_22] : memref<8x128xf32, #tpu.memory_space<vmem>>, vector<8x1xf32>
      %39 = math.log %38 : vector<8x1xf32>
      %40 = arith.addf %37, %39 : vector<8x1xf32>
      %c0_23 = arith.constant 0 : index
      %c2_24 = arith.constant 2 : index
      %41 = vector.load %arg5[%c0_23, %c2_24] : memref<8x128xf32, #tpu.memory_space<vmem>>, vector<8x1xf32>
      %42 = arith.subf %40, %41 : vector<8x1xf32>
      %c0_25 = arith.constant 0 : index
      %c0_26 = arith.constant 0 : index
      %43 = vector.load %arg4[%c0_25, %c0_26] : memref<8x1xf32, #tpu.memory_space<vmem>>, vector<8x1xf32>
      tpu.vector_store %arg4[%c0_25, %c0_26], %42 {strides = array<i32>} : memref<8x1xf32, #tpu.memory_space<vmem>>, vector<8x1xf32>,
    } else {
    }
    return
  }
  func.func @transform_0(%arg0: i32, %arg1: i32) -> (i32, i32) {
    %c0_i32 = arith.constant 0 : i32
    return %arg0, %arg1 : i32, i32
  }
  func.func @transform_1(%arg0: i32, %arg1: i32) -> (i32, i32) {
    %c0_i32 = arith.constant 0 : i32
    %c0_i32_0 = arith.constant 0 : i32
    return %arg0, %c0_i32 : i32, i32
  }
  func.func @transform_2(%arg0: i32, %arg1: i32) -> (i32, i32) {
    %c0_i32 = arith.constant 0 : i32
    %c0_i32_0 = arith.constant 0 : i32
    return %arg0, %c0_i32 : i32, i32
  }
}

</mosaic_0001>

<llo_original>
// kernel: cross_entropy_loss.1
$region0: #{cross_entropy_loss.1}
  #allocation0 [shape = 'u32[]', space=smem, size = 0x4, offset = 0x4, fixed_abs, tag = 'smem constant byte address 0x4 - core index']
  #allocation1 [shape = 'u32[144,128]{1,0:T(1,128)}', space=vmem, size = 0x12000, scoped, tag = 'internal scratch']
  #allocation2 [shape = 'f32[8,128]{1,0:T(8,128)}', space=vmem, size = 0x1000, scoped, tag = 'scratch operand']
  %s0 = inlined_call_operand.vmem [shape: f32[8,32], index: 0, kind: input, shape index: {}]
  %s1 = inlined_call_operand.vmem [shape: s32[8,1], index: 1, kind: input, shape index: {}]
  %s2 = inlined_call_operand.vmem [shape: f32[8,1], index: 2, kind: output, shape index: {}]
  %s3 = sld [smem:[#allocation0]]
  $region26: #{cross_entropy_loss.1} parent=0
    _
  %s5 = ssub.s32 1, %s3
  %s6 = scalar_select 0, %s5, %s3
  // Predicated region
  $region2: #{cross_entropy_loss.1} parent=0 // pred_check
    _
  $region3: #{cross_entropy_loss.1} parent=0 // pred_check_branch
    %8 = sbr.rel (0) target = $region5
  $region4: #{cross_entropy_loss.1} parent=0 // pred_region
    _
  $region5: #{cross_entropy_loss.1} parent=0 // pred_fallthru
    _
  // Predicated region
  $region6: #{cross_entropy_loss.1} parent=0 // pred_check
    _
  $region7: #{cross_entropy_loss.1} parent=0 // pred_check_branch
    %10 = sbr.rel (0) target = $region9
  $region8: #{cross_entropy_loss.1} parent=0 // pred_region
    _
  $region9: #{cross_entropy_loss.1} parent=0 // pred_fallthru
    _
  %p11 = scmp.eq.s32.totalorder 0, 0
  // Predicated region
  $region10: #{cross_entropy_loss.1} parent=0 // pred_check
    %p12 = pneg %p11
  $region11: #{cross_entropy_loss.1} parent=0 // pred_check_branch
    %14 = sbr.rel (%p12) target = $region13
  $region12: #{cross_entropy_loss.1} parent=0 // pred_region
    %v15 = vlaneseq
    %v16 = vand.u32 %v15, 127
    %vm17 = vcmp.eq.s32.totalorder %v16, 0
    %v18 = vsel %vm17, -inf, 0.0
    %19 = vst [vmem:[#allocation2] sm:$0xff] %v18
  $region13: #{cross_entropy_loss.1} parent=0 // pred_fallthru
    _
  %v20 = vld [vmem:[%s0] sm:$0xff]
  %v21 = vld [vmem:[%s1] sm:$0xff]
  %v22 = vlaneseq
  %v23 = vand.u32 %v22, 127
  %s24 = smul.u32 0, 32
  %v25 = vstv %s24
  %v26 = vsub.s32 %v21, %v25
  %v27 = vld [vmem:[#allocation2] sm:$0xff]
  %28 = vset.pattern.permute.xlu0 0
  %29 = vperm.xlu0 %28, %v26
  %v30 = vpop.permute.xlu0 %29
  %vm31 = vcmp.eq.s32.totalorder %v23, %v30
  %v32 = vsel %vm31, %v20, 0.0
  %vm33 = vcmask 261120
  %v34 = vsel %vm33, %v32, 0.0
  %35 = vadd.xlane.f32.xlu0 %v34
  %v36 = vpop.xlane.xlu0 %35
  %v37 = vadd.f32 %v27, %v36
  %vm38 = vcmask 23568
  %39 = vst.msk [vmem:[#allocation2] sm:$0xff] %vm38, %v37
  %v40 = vsel %vm33, %v20, -inf
  %41 = vmax.xlane.f32.xlu0 %v40
  %v42 = vpop.xlane.xlu0 %41
  %v43 = vld [vmem:[#allocation2] sm:$0xff]
  %v44 = vmax.f32 %v43, %v42
  %v45 = vsub.f32 %v43, %v44
  %v46 = vmul.f32 %v45, 1.442695
  %v47 = vpow.pop %v46
  %49 = vrot.lane.b32.xlu0 %v47, 1
  %v50 = vpop.permute.xlu0 %49
  %v52 = vmul.f32 %v43, %v50
  %54 = vset.pattern.permute.xlu0 0
  %55 = vperm.xlu0 %54, %v44
  %v56 = vpop.permute.xlu0 %55
  %v58 = vsub.f32 %v20, %v56
  %v59 = vmul.f32 %v58, 1.442695
  %v60 = vpow.pop %v59
  %v61 = vsel %vm33, %v60, 0.0
  %62 = vadd.xlane.f32.xlu0 %v61
  %v63 = vpop.xlane.xlu0 %62
  %v64 = vadd.f32 %v52, %v63
  %vm65 = vcmask 15368
  %66 = vst.msk [vmem:[#allocation2] sm:$0xff] %vm65, %v64
  %vm67 = vcmask 7168
  %68 = vst.msk [vmem:[#allocation2] sm:$0xff] %vm67, %v44
  // Predicated region
  $region14: #{cross_entropy_loss.1} parent=0 // pred_check
    %p69 = pneg %p11
  $region15: #{cross_entropy_loss.1} parent=0 // pred_check_branch
    %71 = sbr.rel (%p69) target = $region17
  $region16: #{cross_entropy_loss.1} parent=0 // pred_region
    %v72 = vld [vmem:[#allocation2] sm:$0xff]
    %v73 = vlog2.pop %v72
    %v74 = vmul.f32 %v73, 0.6931472
    %76 = vrot.lane.b32.xlu0 %v74, 127
    %v77 = vpop.permute.xlu0 %76
    %v79 = vadd.f32 %v72, %v77
    %81 = vrot.lane.b32.xlu0 %v72, 126
    %v82 = vpop.permute.xlu0 %81
    %v84 = vsub.f32 %v79, %v82
    %85 = vst.msk [vmem:[%s2] sm:$0xff] %vm67, %v84
  $region17: #{cross_entropy_loss.1} parent=0 // pred_fallthru
    _
  // Predicated region
  $region18: #{cross_entropy_loss.1} parent=0 // pred_check
    _
  $region19: #{cross_entropy_loss.1} parent=0 // pred_check_branch
    %87 = sbr.rel (0) target = $region21
  $region20: #{cross_entropy_loss.1} parent=0 // pred_region
    _
  $region21: #{cross_entropy_loss.1} parent=0 // pred_fallthru
    _
  // Predicated region
  $region22: #{cross_entropy_loss.1} parent=0 // pred_check
    _
  $region23: #{cross_entropy_loss.1} parent=0 // pred_check_branch
    %89 = sbr.rel (0) target = $region25
  $region24: #{cross_entropy_loss.1} parent=0 // pred_region
    _
  $region25: #{cross_entropy_loss.1} parent=0 // pred_fallthru
    _

</llo_original>
